<compile_context>
chip_gen: v6e
topology: v6e:2x2x1
jax: 0.10.0
libtpu: 0.0.40
codegen_flags: <defaults>
</compile_context>

<pallas_src>
import jax
import jax.numpy as jnp
from jax import lax
from jax.experimental import pallas as pl
from jax.experimental.pallas import tpu as pltpu


def _round_up(x, m):
    return (x + m - 1) // m * m


def make_cnn_kernel(filter_sizes, batch, seq_len, n_filters):
    filter_sizes = tuple(filter_sizes)

    def kernel(text_ref, embtab_ref, wall_ref, ball_ref, fcw_ref, fcb_ref,
               out_ref, y_ref):
        B, S, F = batch, seq_len, n_filters
        BS = B * S
        v_pad = embtab_ref.shape[0]
        c_pad = wall_ref.shape[1]

        # ---- 1. embedding lookup as one-hot matmul (MXU) -----------------
        tok = text_ref[...]                                    # (B*S, 1) int32
        vocab_iota = lax.broadcasted_iota(jnp.int32, (BS, v_pad), 1)
        onehot = (vocab_iota == tok).astype(jnp.float32)       # (B*S, V_pad)
        emb2d = jnp.dot(onehot, embtab_ref[...],
                        preferred_element_type=jnp.float32)    # (B*S, E)

        # ---- 2. every conv tap of every filter size: ONE wide matmul -----
        # TODO(synk): at realistic sizes, cast activations/weights to bf16 for
        # the v6e/v7x MXU (keep f32 accumulation) and tile batch over a
        # ("parallel",) grid so v7x's second TensorCore is used.
        y = jnp.dot(emb2d, wall_ref[...],
                    preferred_element_type=jnp.float32)        # (B*S, C_pad)
        y_ref[...] = y.reshape(B, S, c_pad)                    # lane-dense store

        # ---- 3. shifted-chunk sums + bias + ReLU + max-over-time ---------
        b_all = ball_ref[...]                                  # (1, n*F)
        pooled = []
        tap_base = 0
        for k, fs in enumerate(filter_sizes):
            s_out = S - fs + 1
            acc = jnp.zeros((B, s_out, F), jnp.float32)
            for i in range(fs):
                col = (tap_base + i) * F
                acc = acc + y_ref[:, i:i + s_out, col:col + F]
            acc = jnp.maximum(acc + b_all[:, k * F:(k + 1) * F], 0.0)
            pooled.append(jnp.max(acc, axis=1))                # (B, F)
            tap_base += fs
        cat = jnp.concatenate(pooled, axis=1)                  # (B, n*F)

        # ---- 4. single FC matmul + single full-width store ---------------
        # TODO(synk): dropout modeled in eval mode (identity); torch
        # training-mode dropout RNG has no matching Pallas semantics.
        out_ref[...] = (jnp.dot(cat, fcw_ref[...],
                                preferred_element_type=jnp.float32)
                        + fcb_ref[...])

    return kernel


def cnn_forward(text, emb_table, conv_ws, conv_bs, fc_w, fc_b,
                n_filters, filter_sizes, output_dim):
    """Forward pass of the torch CNN module.

    text:      (B, S) int32 token ids
    emb_table: (V, E) f32
    conv_ws:   list of torch-layout conv weights, conv_ws[k] is (F, 1, fs_k, E)
    conv_bs:   list of (F,) conv biases
    fc_w:      (O, n*F) torch Linear weight;  fc_b: (O,)
    """
    B, S = text.shape
    V, E = emb_table.shape
    F = n_filters
    O = output_dim
    assert S >= max(filter_sizes), "seq_len must be >= max(filter_sizes)"

    LANE = 128
    # Pack every conv tap of every filter size into one wide (E, sum(fs)*F)
    # weight -> the whole conv stack is one lane-dense matmul.
    taps = [w[:, 0, i, :].T
            for w, fs in zip(conv_ws, filter_sizes) for i in range(fs)]
    w_all = jnp.concatenate(taps, axis=1)                       # (E, sum(fs)*F)
    C = w_all.shape[1]
    C_pad = _round_up(C, LANE)
    w_all = jnp.pad(w_all, ((0, 0), (0, C_pad - C)))

    b_all = jnp.concatenate([b.reshape(1, F) for b in conv_bs], axis=1)

    O_pad = _round_up(O, LANE)
    fcw = jnp.pad(fc_w.T, ((0, 0), (0, O_pad - O)))             # (n*F, O_pad)
    fcb = jnp.pad(fc_b.reshape(1, O), ((0, 0), (0, O_pad - O)))

    V_pad = _round_up(V, LANE)
    emb_pad = jnp.pad(emb_table, ((0, V_pad - V), (0, 0)))      # (V_pad, E)

    text_flat = text.reshape(B * S, 1).astype(jnp.int32)

    kernel = make_cnn_kernel(tuple(filter_sizes), B, S, F)
    vmem = pl.BlockSpec(memory_space=pltpu.MemorySpace.VMEM)
    out = pl.pallas_call(
        kernel,
        out_shape=jax.ShapeDtypeStruct((B, O_pad), jnp.float32),
        in_specs=[vmem] * 6,
        out_specs=vmem,
        scratch_shapes=[pltpu.VMEM((B, S, C_pad), jnp.float32)],
    )(text_flat, emb_pad, w_all, b_all, fcw, fcb)
    return out[:, :O]


if __name__ == "__main__":
    # Module hyper-parameters (small, consistent with the torch __init__).
    vocab_size, embedding_dim = 50, 32
    n_filters, filter_sizes = 16, (3, 4, 5)
    output_dim, pad_idx = 2, 0
    batch, seq_len = 2, 16

    key = jax.random.PRNGKey(0)
    keys = jax.random.split(key, 4 + 2 * len(filter_sizes))
    k_emb, k_txt, k_fcw, k_fcb = keys[0], keys[1], keys[2], keys[3]
    k_conv = keys[4:]

    # Embedding table; padding_idx row zeroed (as nn.Embedding does at init).
    emb_table = 0.1 * jax.random.normal(k_emb, (vocab_size, embedding_dim),
                                        jnp.float32)
    emb_table = emb_table.at[pad_idx].set(0.0)

    text = jax.random.randint(k_txt, (batch, seq_len), 0, vocab_size, jnp.int32)

    conv_ws, conv_bs = [], []
    for i, fs in enumerate(filter_sizes):
        kw, kb = k_conv[2 * i], k_conv[2 * i + 1]
        conv_ws.append(0.1 * jax.random.normal(
            kw, (n_filters, 1, fs, embedding_dim), jnp.float32))  # torch layout
        conv_bs.append(0.1 * jax.random.normal(kb, (n_filters,), jnp.float32))
    fc_w = 0.1 * jax.random.normal(
        k_fcw, (output_dim, len(filter_sizes) * n_filters), jnp.float32)
    fc_b = 0.1 * jax.random.normal(k_fcb, (output_dim,), jnp.float32)

    out = cnn_forward(text, emb_table, conv_ws, conv_bs, fc_w, fc_b,
                      n_filters, filter_sizes, output_dim)
    out = jax.block_until_ready(out)

    # Pure-JAX reference check (same math as the torch forward, eval mode).
    def ref_forward(text_ids):
        emb = emb_table[text_ids]                               # (B, S, E)
        pooled = []
        for fs, w, b in zip(filter_sizes, conv_ws, conv_bs):
            s_out = seq_len - fs + 1
            conv = jnp.zeros((batch, s_out, n_filters), jnp.float32)
            for i in range(fs):
                conv = conv + jnp.einsum('bse,fe->bsf',
                                         emb[:, i:i + s_out, :], w[:, 0, i, :])
            conv = jax.nn.relu(conv + b[None, None, :])
            pooled.append(jnp.max(conv, axis=1))
        cat = jnp.concatenate(pooled, axis=1)
        return cat @ fc_w.T + fc_b[None, :]

    ref = jax.block_until_ready(ref_forward(text))
    assert out.shape == (batch, output_dim)
    # Tolerance covers MXU f32 pass decomposition differences vs XLA einsum.
    assert jnp.allclose(out, ref, atol=1e-3, rtol=1e-3), (out, ref)
    print("KERNEL_OK")
</pallas_src>

<mosaic_0001>
module attributes {stable_mosaic.version = 11 : i64} {
  func.func @kernel(%arg0: memref<32x1xi32, #tpu.memory_space<vmem>>, %arg1: memref<128x32xf32, #tpu.memory_space<vmem>>, %arg2: memref<32x256xf32, #tpu.memory_space<vmem>>, %arg3: memref<1x48xf32, #tpu.memory_space<vmem>>, %arg4: memref<48x128xf32, #tpu.memory_space<vmem>>, %arg5: memref<1x128xf32, #tpu.memory_space<vmem>>, %arg6: memref<2x128xf32, #tpu.memory_space<vmem>>, %arg7: memref<2x16x256xf32, #tpu.memory_space<vmem>>) attributes {dimension_semantics = [], scalar_prefetch = 0 : i64, scratch_operands = 1 : i64, tpu.core_type = #tpu.core_type<tc>} {
    %c0 = arith.constant 0 : index
    %c0_0 = arith.constant 0 : index
    %0 = vector.load %arg0[%c0, %c0_0] : memref<32x1xi32, #tpu.memory_space<vmem>>, vector<32x1xi32>
    %1 = tpu.iota {dimensions = array<i32: 1>} : vector<32x128xi32>
    %2 = vector.broadcast %0 : vector<32x1xi32> to vector<32x128xi32>
    %3 = arith.cmpi eq, %1, %2 : vector<32x128xi32>
    %4 = arith.extui %3 : vector<32x128xi1> to vector<32x128xi32>
    %5 = arith.sitofp %4 : vector<32x128xi32> to vector<32x128xf32>
    %c0_1 = arith.constant 0 : index
    %c0_2 = arith.constant 0 : index
    %6 = vector.load %arg1[%c0_1, %c0_2] : memref<128x32xf32, #tpu.memory_space<vmem>>, vector<128x32xf32>
    %cst = arith.constant dense<0.000000e+00> : vector<32x32xf32>
    %7 = tpu.matmul %5, %6, %cst {dimension_numbers = #tpu.dot_dimension_numbers<[1], [0], [0], [1], [0, 0, 1, 1], [], []>} : vector<32x128xf32>, vector<128x32xf32>, vector<32x32xf32> -> vector<32x32xf32>
    %c0_3 = arith.constant 0 : index
    %c0_4 = arith.constant 0 : index
    %8 = vector.load %arg2[%c0_3, %c0_4] : memref<32x256xf32, #tpu.memory_space<vmem>>, vector<32x256xf32>
    %cst_5 = arith.constant dense<0.000000e+00> : vector<32x256xf32>
    %9 = tpu.matmul %7, %8, %cst_5 {dimension_numbers = #tpu.dot_dimension_numbers<[1], [0], [0], [1], [0, 0, 1, 1], [], []>} : vector<32x32xf32>, vector<32x256xf32>, vector<32x256xf32> -> vector<32x256xf32>
    %10 = vector.shape_cast %9 : vector<32x256xf32> to vector<2x16x256xf32>
    %c0_6 = arith.constant 0 : index
    %c0_7 = arith.constant 0 : index
    %c0_8 = arith.constant 0 : index
    %11 = vector.load %arg7[%c0_6, %c0_7, %c0_8] : memref<2x16x256xf32, #tpu.memory_space<vmem>>, vector<2x16x256xf32>
    tpu.vector_store %arg7[%c0_6, %c0_7, %c0_8], %10 {strides = array<i32>} : memref<2x16x256xf32, #tpu.memory_space<vmem>>, vector<2x16x256xf32>,
    %c0_9 = arith.constant 0 : index
    %c0_10 = arith.constant 0 : index
    %12 = vector.load %arg3[%c0_9, %c0_10] : memref<1x48xf32, #tpu.memory_space<vmem>>, vector<1x48xf32>
    %cst_11 = arith.constant 0.000000e+00 : f32
    %13 = vector.broadcast %cst_11 : f32 to vector<2x14x16xf32>
    %c0_12 = arith.constant 0 : index
    %c0_13 = arith.constant 0 : index
    %c0_14 = arith.constant 0 : index
    %14 = vector.load %arg7[%c0_12, %c0_13, %c0_14] : memref<2x16x256xf32, #tpu.memory_space<vmem>>, vector<2x14x16xf32>
    %15 = arith.addf %13, %14 : vector<2x14x16xf32>
    %c0_15 = arith.constant 0 : index
    %c1 = arith.constant 1 : index
    %c16 = arith.constant 16 : index
    %16 = vector.load %arg7[%c0_15, %c1, %c16] : memref<2x16x256xf32, #tpu.memory_space<vmem>>, vector<2x14x16xf32>
    %17 = arith.addf %15, %16 : vector<2x14x16xf32>
    %c0_16 = arith.constant 0 : index
    %c2 = arith.constant 2 : index
    %c32 = arith.constant 32 : index
    %18 = vector.load %arg7[%c0_16, %c2, %c32] : memref<2x16x256xf32, #tpu.memory_space<vmem>>, vector<2x14x16xf32>
    %19 = arith.addf %17, %18 : vector<2x14x16xf32>
    %20 = vector.extract_strided_slice %12 {offsets = [0, 0], sizes = [1, 16], strides = [1, 1]} : vector<1x48xf32> to vector<1x16xf32>
    %21 = vector.shape_cast %20 : vector<1x16xf32> to vector<1x1x16xf32>
    %22 = vector.broadcast %21 : vector<1x1x16xf32> to vector<2x14x16xf32>
    %23 = arith.addf %19, %22 : vector<2x14x16xf32>
    %cst_17 = arith.constant 0.000000e+00 : f32
    %24 = vector.broadcast %cst_17 : f32 to vector<2x14x16xf32>
    %25 = arith.maximumf %23, %24 : vector<2x14x16xf32>
    %cst_18 = arith.constant dense<0xFF800000> : vector<2x16xf32>
    %26 = vector.multi_reduction <maximumf>, %25, %cst_18 [1] : vector<2x14x16xf32> to vector<2x16xf32>
    %cst_19 = arith.constant 0.000000e+00 : f32
    %27 = vector.broadcast %cst_19 : f32 to vector<2x13x16xf32>
    %c0_20 = arith.constant 0 : index
    %c0_21 = arith.constant 0 : index
    %c48 = arith.constant 48 : index
    %28 = vector.load %arg7[%c0_20, %c0_21, %c48] : memref<2x16x256xf32, #tpu.memory_space<vmem>>, vector<2x13x16xf32>
    %29 = arith.addf %27, %28 : vector<2x13x16xf32>
    %c0_22 = arith.constant 0 : index
    %c1_23 = arith.constant 1 : index
    %c64 = arith.constant 64 : index
    %30 = vector.load %arg7[%c0_22, %c1_23, %c64] : memref<2x16x256xf32, #tpu.memory_space<vmem>>, vector<2x13x16xf32>
    %31 = arith.addf %29, %30 : vector<2x13x16xf32>
    %c0_24 = arith.constant 0 : index
    %c2_25 = arith.constant 2 : index
    %c80 = arith.constant 80 : index
    %32 = vector.load %arg7[%c0_24, %c2_25, %c80] : memref<2x16x256xf32, #tpu.memory_space<vmem>>, vector<2x13x16xf32>
    %33 = arith.addf %31, %32 : vector<2x13x16xf32>
    %c0_26 = arith.constant 0 : index
    %c3 = arith.constant 3 : index
    %c96 = arith.constant 96 : index
    %34 = vector.load %arg7[%c0_26, %c3, %c96] : memref<2x16x256xf32, #tpu.memory_space<vmem>>, vector<2x13x16xf32>
    %35 = arith.addf %33, %34 : vector<2x13x16xf32>
    %36 = vector.extract_strided_slice %12 {offsets = [0, 16], sizes = [1, 16], strides = [1, 1]} : vector<1x48xf32> to vector<1x16xf32>
    %37 = vector.shape_cast %36 : vector<1x16xf32> to vector<1x1x16xf32>
    %38 = vector.broadcast %37 : vector<1x1x16xf32> to vector<2x13x16xf32>
    %39 = arith.addf %35, %38 : vector<2x13x16xf32>
    %cst_27 = arith.constant 0.000000e+00 : f32
    %40 = vector.broadcast %cst_27 : f32 to vector<2x13x16xf32>
    %41 = arith.maximumf %39, %40 : vector<2x13x16xf32>
    %cst_28 = arith.constant dense<0xFF800000> : vector<2x16xf32>
    %42 = vector.multi_reduction <maximumf>, %41, %cst_28 [1] : vector<2x13x16xf32> to vector<2x16xf32>
    %cst_29 = arith.constant 0.000000e+00 : f32
    %43 = vector.broadcast %cst_29 : f32 to vector<2x12x16xf32>
    %c0_30 = arith.constant 0 : index
    %c0_31 = arith.constant 0 : index
    %c112 = arith.constant 112 : index
    %44 = vector.load %arg7[%c0_30, %c0_31, %c112] : memref<2x16x256xf32, #tpu.memory_space<vmem>>, vector<2x12x16xf32>
    %45 = arith.addf %43, %44 : vector<2x12x16xf32>
    %c0_32 = arith.constant 0 : index
    %c1_33 = arith.constant 1 : index
    %c128 = arith.constant 128 : index
    %46 = vector.load %arg7[%c0_32, %c1_33, %c128] : memref<2x16x256xf32, #tpu.memory_space<vmem>>, vector<2x12x16xf32>
    %47 = arith.addf %45, %46 : vector<2x12x16xf32>
    %c0_34 = arith.constant 0 : index
    %c2_35 = arith.constant 2 : index
    %c144 = arith.constant 144 : index
    %48 = vector.load %arg7[%c0_34, %c2_35, %c144] : memref<2x16x256xf32, #tpu.memory_space<vmem>>, vector<2x12x16xf32>
    %49 = arith.addf %47, %48 : vector<2x12x16xf32>
    %c0_36 = arith.constant 0 : index
    %c3_37 = arith.constant 3 : index
    %c160 = arith.constant 160 : index
    %50 = vector.load %arg7[%c0_36, %c3_37, %c160] : memref<2x16x256xf32, #tpu.memory_space<vmem>>, vector<2x12x16xf32>
    %51 = arith.addf %49, %50 : vector<2x12x16xf32>
    %c0_38 = arith.constant 0 : index
    %c4 = arith.constant 4 : index
    %c176 = arith.constant 176 : index
    %52 = vector.load %arg7[%c0_38, %c4, %c176] : memref<2x16x256xf32, #tpu.memory_space<vmem>>, vector<2x12x16xf32>
    %53 = arith.addf %51, %52 : vector<2x12x16xf32>
    %54 = vector.extract_strided_slice %12 {offsets = [0, 32], sizes = [1, 16], strides = [1, 1]} : vector<1x48xf32> to vector<1x16xf32>
    %55 = vector.shape_cast %54 : vector<1x16xf32> to vector<1x1x16xf32>
    %56 = vector.broadcast %55 : vector<1x1x16xf32> to vector<2x12x16xf32>
    %57 = arith.addf %53, %56 : vector<2x12x16xf32>
    %cst_39 = arith.constant 0.000000e+00 : f32
    %58 = vector.broadcast %cst_39 : f32 to vector<2x12x16xf32>
    %59 = arith.maximumf %57, %58 : vector<2x12x16xf32>
    %cst_40 = arith.constant dense<0xFF800000> : vector<2x16xf32>
    %60 = vector.multi_reduction <maximumf>, %59, %cst_40 [1] : vector<2x12x16xf32> to vector<2x16xf32>
    %61 = tpu.concatenate %26, %42, %60 in 1 : vector<2x16xf32>, vector<2x16xf32>, vector<2x16xf32> -> vector<2x48xf32>
    %c0_41 = arith.constant 0 : index
    %c0_42 = arith.constant 0 : index
    %62 = vector.load %arg4[%c0_41, %c0_42] : memref<48x128xf32, #tpu.memory_space<vmem>>, vector<48x128xf32>
    %cst_43 = arith.constant dense<0.000000e+00> : vector<2x128xf32>
    %63 = tpu.matmul %61, %62, %cst_43 {dimension_numbers = #tpu.dot_dimension_numbers<[1], [0], [0], [1], [0, 0, 1, 1], [], []>} : vector<2x48xf32>, vector<48x128xf32>, vector<2x128xf32> -> vector<2x128xf32>
    %c0_44 = arith.constant 0 : index
    %c0_45 = arith.constant 0 : index
    %64 = vector.load %arg5[%c0_44, %c0_45] : memref<1x128xf32, #tpu.memory_space<vmem>>, vector<1x128xf32>
    %65 = vector.broadcast %64 : vector<1x128xf32> to vector<2x128xf32>
    %66 = arith.addf %63, %65 : vector<2x128xf32>
    %c0_46 = arith.constant 0 : index
    %c0_47 = arith.constant 0 : index
    %67 = vector.load %arg6[%c0_46, %c0_47] : memref<2x128xf32, #tpu.memory_space<vmem>>, vector<2x128xf32>
    tpu.vector_store %arg6[%c0_46, %c0_47], %66 {strides = array<i32>} : memref<2x128xf32, #tpu.memory_space<vmem>>, vector<2x128xf32>,
    return
  }
}

</mosaic_0001>

<llo_original>
// kernel: tpu_custom_call.1
$region0: #{tpu_custom_call.1}
  #allocation0 [shape = 'u32[]', space=smem, size = 0x4, offset = 0x4, fixed_abs, tag = 'smem constant byte address 0x4 - core index']
  #allocation1 [shape = 'u32[144,128]{1,0:T(1,128)}', space=vmem, size = 0x12000, scoped, tag = 'internal scratch']
  #allocation2 [shape = 'f32[2,16,256]{2,1,0:T(8,128)}', space=vmem, size = 0x8000, scoped, tag = 'scratch operand']
  %s0 = inlined_call_operand.vmem [shape: s32[32,1], index: 0, kind: input, shape index: {}]
  %s1 = inlined_call_operand.vmem [shape: f32[128,32], index: 1, kind: input, shape index: {}]
  %s2 = inlined_call_operand.vmem [shape: f32[32,256], index: 2, kind: input, shape index: {}]
  %s3 = inlined_call_operand.vmem [shape: f32[1,48], index: 3, kind: input, shape index: {}]
  %s4 = inlined_call_operand.vmem [shape: f32[48,128], index: 4, kind: input, shape index: {}]
  %s5 = inlined_call_operand.vmem [shape: f32[1,128], index: 5, kind: input, shape index: {}]
  %s6 = inlined_call_operand.hbm [shape: f32[2,128], index: 6, kind: output, shape index: {}]
  %s7 = sld [smem:[#allocation0]]
  $region34: #{tpu_custom_call.1} parent=0
    _
  %s9 = ssub.s32 1, %s7
  %s10 = scalar_select 0, %s9, %s7
  $region1: #{tpu_custom_call.1} parent=0
    #allocation3 [shape = 'u8[1024]{0}', space=vmem, size = 0x400, scoped, tag = 'output window, operand 0, single buffered']
    #allocation4 [shape = 's32[1]{0}', space=sflag, size = 0x4, scoped, tag = 'scoped memory for tpu_custom_call.1']
    %11 = vsyncpa [#allocation4], 0
    // Predicated region
    $region2: #{tpu_custom_call.1} parent=1 // pred_check
      _
    $region3: #{tpu_custom_call.1} parent=1 // pred_check_branch
      %13 = sbr.rel (0) target = $region5
    $region4: #{tpu_custom_call.1} parent=1 // pred_region
      _
    $region5: #{tpu_custom_call.1} parent=1 // pred_fallthru
      _
    // Predicated region
    $region6: #{tpu_custom_call.1} parent=1 // pred_check
      _
    $region7: #{tpu_custom_call.1} parent=1 // pred_check_branch
      %15 = sbr.rel (0) target = $region9
    $region8: #{tpu_custom_call.1} parent=1 // pred_region
      _
    $region9: #{tpu_custom_call.1} parent=1 // pred_fallthru
      _
    // Predicated region
    $region10: #{tpu_custom_call.1} parent=1 // pred_check
      _
    $region11: #{tpu_custom_call.1} parent=1 // pred_check_branch
      %17 = sbr.rel (0) target = $region13
    $region12: #{tpu_custom_call.1} parent=1 // pred_region
      _
    $region13: #{tpu_custom_call.1} parent=1 // pred_fallthru
      _
    // Predicated region
    $region14: #{tpu_custom_call.1} parent=1 // pred_check
      _
    $region15: #{tpu_custom_call.1} parent=1 // pred_check_branch
      %19 = sbr.rel (0) target = $region17
    $region16: #{tpu_custom_call.1} parent=1 // pred_region
      _
    $region17: #{tpu_custom_call.1} parent=1 // pred_fallthru
      _
    // Predicated region
    $region18: #{tpu_custom_call.1} parent=1 // pred_check
      _
    $region19: #{tpu_custom_call.1} parent=1 // pred_check_branch
      %21 = sbr.rel (0) target = $region21
    $region20: #{tpu_custom_call.1} parent=1 // pred_region
      _
    $region21: #{tpu_custom_call.1} parent=1 // pred_fallthru
      _
    // Predicated region
    $region22: #{tpu_custom_call.1} parent=1 // pred_check
      _
    $region23: #{tpu_custom_call.1} parent=1 // pred_check_branch
      %23 = sbr.rel (0) target = $region25
    $region24: #{tpu_custom_call.1} parent=1 // pred_region
      _
    $region25: #{tpu_custom_call.1} parent=1 // pred_fallthru
      _
    %v24 = vld [vmem:[%s0] sm:$0xff]
    %v25 = vld [vmem:[%s0 + $0x8] sm:$0xff]
    %v26 = vld [vmem:[%s0 + $0x10] sm:$0xff]
    %v27 = vld [vmem:[%s0 + $0x18] sm:$0xff]
    %v28 = vlaneseq
    %v29 = vand.u32 %v28, 127
    %30 = vset.pattern.permute.xlu0 0
    %31 = vperm.xlu0 %30, %v24
    %v32 = vpop.permute.xlu0 %31
    %33 = vset.pattern.permute.xlu0 0
    %34 = vperm.xlu0 %33, %v25
    %v35 = vpop.permute.xlu0 %34
    %36 = vset.pattern.permute.xlu0 0
    %37 = vperm.xlu0 %36, %v26
    %v38 = vpop.permute.xlu0 %37
    %39 = vset.pattern.permute.xlu0 0
    %40 = vperm.xlu0 %39, %v27
    %v41 = vpop.permute.xlu0 %40
    %vm42 = vcmp.eq.s32.totalorder %v29, %v32
    %vm43 = vcmp.eq.s32.totalorder %v29, %v35
    %vm44 = vcmp.eq.s32.totalorder %v29, %v38
    %vm45 = vcmp.eq.s32.totalorder %v29, %v41
    %v46 = vsel %vm42, 1, 0
    %v47 = vsel %vm43, 1, 0
    %v48 = vsel %vm44, 1, 0
    %v49 = vsel %vm45, 1, 0
    %v50 = vcvt.s32.f32 %v46
    %v51 = vcvt.s32.f32 %v47
    %v52 = vcvt.s32.f32 %v48
    %v53 = vcvt.s32.f32 %v49
    %v54 = vld [vmem:[%s1] sm:$0xff]
    %v55 = vld [vmem:[%s1 + $0x8] sm:$0xff]
    %v56 = vld [vmem:[%s1 + $0x10] sm:$0xff]
    %v57 = vld [vmem:[%s1 + $0x18] sm:$0xff]
    %v58 = vld [vmem:[%s1 + $0x20] sm:$0xff]
    %v59 = vld [vmem:[%s1 + $0x28] sm:$0xff]
    %v60 = vld [vmem:[%s1 + $0x30] sm:$0xff]
    %v61 = vld [vmem:[%s1 + $0x38] sm:$0xff]
    %v62 = vld [vmem:[%s1 + $0x40] sm:$0xff]
    %v63 = vld [vmem:[%s1 + $0x48] sm:$0xff]
    %v64 = vld [vmem:[%s1 + $0x50] sm:$0xff]
    %v65 = vld [vmem:[%s1 + $0x58] sm:$0xff]
    %v66 = vld [vmem:[%s1 + $0x60] sm:$0xff]
    %v67 = vld [vmem:[%s1 + $0x68] sm:$0xff]
    %v68 = vld [vmem:[%s1 + $0x70] sm:$0xff]
    %v69 = vld [vmem:[%s1 + $0x78] sm:$0xff]
    %70 = vmatprep.subr.mxu0 0.0
    %71 = vmatpush1.msra.mxu0 %v69
    %72 = vmatprep.subr.mxu0 0.0
    %73 = vmatpush1.msra.mxu0 %v68
    %74 = vmatprep.subr.mxu0 0.0
    %75 = vmatpush1.msra.mxu0 %v67
    %76 = vmatprep.subr.mxu0 0.0
    %77 = vmatpush1.msra.mxu0 %v66
    %78 = vmatprep.subr.mxu0 0.0
    %79 = vmatpush1.msra.mxu0 %v65
    %80 = vmatprep.subr.mxu0 0.0
    %81 = vmatpush1.msra.mxu0 %v64
    %82 = vmatprep.subr.mxu0 0.0
    %83 = vmatpush1.msra.mxu0 %v63
    %84 = vmatprep.subr.mxu0 0.0
    %85 = vmatpush1.msra.mxu0 %v62
    %86 = vmatprep.subr.mxu0 0.0
    %87 = vmatpush1.msra.mxu0 %v61
    %88 = vmatprep.subr.mxu0 0.0
    %89 = vmatpush1.msra.mxu0 %v60
    %90 = vmatprep.subr.mxu0 0.0
    %91 = vmatpush1.msra.mxu0 %v59
    %92 = vmatprep.subr.mxu0 0.0
    %93 = vmatpush1.msra.mxu0 %v58
    %94 = vmatprep.subr.mxu0 0.0
    %95 = vmatpush1.msra.mxu0 %v57
    %96 = vmatprep.subr.mxu0 0.0
    %97 = vmatpush1.msra.mxu0 %v56
    %98 = vmatprep.subr.mxu0 0.0
    %99 = vmatpush1.msra.mxu0 %v55
    %100 = vmatprep.subr.mxu0 0.0
    %101 = vmatpush1.msra.mxu0 %v54
    %102 = vmatprep.subr.mxu0 0.0
    %103 = vmatpush2.msra.mxu0 0.0
    %104 = vmatprep.subr.mxu0 0.0
    %105 = vmatpush2.msra.mxu0 0.0
    %106 = vmatprep.subr.mxu0 0.0
    %107 = vmatpush2.msra.mxu0 0.0
    %108 = vmatprep.subr.mxu0 0.0
    %109 = vmatpush2.msra.mxu0 0.0
    %110 = vmatprep.subr.mxu0 0.0
    %111 = vmatpush2.msra.mxu0 0.0
    %112 = vmatprep.subr.mxu0 0.0
    %113 = vmatpush2.msra.mxu0 0.0
    %114 = vmatprep.subr.mxu0 0.0
    %115 = vmatpush2.msra.mxu0 0.0
    %116 = vmatprep.subr.mxu0 0.0
    %117 = vmatpush2.msra.mxu0 0.0
    %118 = vmatprep.subr.mxu0 0.0
    %119 = vmatpush2.msra.mxu0 0.0
    %120 = vmatprep.subr.mxu0 0.0
    %121 = vmatpush2.msra.mxu0 0.0
    %122 = vmatprep.subr.mxu0 0.0
    %123 = vmatpush2.msra.mxu0 0.0
    %124 = vmatprep.subr.mxu0 0.0
    %125 = vmatpush2.msra.mxu0 0.0
    %126 = vmatprep.subr.mxu0 0.0
    %127 = vmatpush2.msra.mxu0 0.0
    %128 = vmatprep.subr.mxu0 0.0
    %129 = vmatpush2.msra.mxu0 0.0
    %130 = vmatprep.subr.mxu0 0.0
    %131 = vmatpush2.msra.mxu0 0.0
    %132 = vmatprep.subr.mxu0 0.0
    %133 = vmatpush2.msra.mxu0 0.0
    %134 = vmatprep.mubr.f32.mxu0 0.0
    %135 = vmatmul.mubr.f32.gmra.mxu0 %v50
    %v136 = vpop.f32.mrf.mxu0
    %v137 = vadd.f32 0.0, %v136
    %v138 = vpop.f32.mrf.mxu0
    %139 = vmatprep.mubr.f32.mxu0 0.0
    %140 = vmatmul.mubr.f32.gmra.mxu0 %v51
    %v141 = vpop.f32.mrf.mxu0
    %v142 = vadd.f32 0.0, %v141
    %v143 = vpop.f32.mrf.mxu0
    %144 = vmatprep.mubr.f32.mxu0 0.0
    %145 = vmatmul.mubr.f32.gmra.mxu0 %v52
    %v146 = vpop.f32.mrf.mxu0
    %v147 = vadd.f32 0.0, %v146
    %v148 = vpop.f32.mrf.mxu0
    %149 = vmatprep.mubr.f32.mxu0 0.0
    %150 = vmatmul.mubr.f32.gmra.mxu0 %v53
    %v151 = vpop.f32.mrf.mxu0
    %v152 = vadd.f32 0.0, %v151
    %v153 = vpop.f32.mrf.mxu0
    %154 = vdwg.mxu0
    %v155 = vld [vmem:[%s2] sm:$0xff]
    %v156 = vld [vmem:[%s2 + $0x8] sm:$0xff]
    %v157 = vld [vmem:[%s2 + $0x10] sm:$0xff]
    %v158 = vld [vmem:[%s2 + $0x18] sm:$0xff]
    %v159 = vld [vmem:[%s2 + $0x20] sm:$0xff]
    %v160 = vld [vmem:[%s2 + $0x28] sm:$0xff]
    %v161 = vld [vmem:[%s2 + $0x30] sm:$0xff]
    %v162 = vld [vmem:[%s2 + $0x38] sm:$0xff]
    %vm163 = vcmask 261120
    %v165 = vsel %vm163, %v137, 0
    %v168 = vsel %vm163, %v142, 0
    %v171 = vsel %vm163, %v147, 0
    %v174 = vsel %vm163, %v152, 0
    %176 = vmatprep.subr.mxu0 0.0
    %177 = vmatpush1.msra.mxu0 0.0
    %178 = vmatprep.subr.mxu0 0.0
    %179 = vmatpush1.msra.mxu0 0.0
    %180 = vmatprep.subr.mxu0 0.0
    %181 = vmatpush1.msra.mxu0 0.0
    %182 = vmatprep.subr.mxu0 0.0
    %183 = vmatpush1.msra.mxu0 0.0
    %184 = vmatprep.subr.mxu0 0.0
    %185 = vmatpush1.msra.mxu0 0.0
    %186 = vmatprep.subr.mxu0 0.0
    %187 = vmatpush1.msra.mxu0 0.0
    %188 = vmatprep.subr.mxu0 0.0
    %189 = vmatpush1.msra.mxu0 0.0
    %190 = vmatprep.subr.mxu0 0.0
    %191 = vmatpush1.msra.mxu0 0.0
    %192 = vmatprep.subr.mxu0 0.0
    %193 = vmatpush1.msra.mxu0 0.0
    %194 = vmatprep.subr.mxu0 0.0
    %195 = vmatpush1.msra.mxu0 0.0
    %196 = vmatprep.subr.mxu0 0.0
    %197 = vmatpush1.msra.mxu0 0.0
    %198 = vmatprep.subr.mxu0 0.0
    %199 = vmatpush1.msra.mxu0 0.0
    %200 = vmatprep.subr.mxu0 %v162
    %201 = vmatpush1.msra.mxu0 %v161
    %202 = vmatprep.subr.mxu0 %v160
    %203 = vmatpush1.msra.mxu0 %v159
    %204 = vmatprep.subr.mxu0 %v158
    %205 = vmatpush1.msra.mxu0 %v157
    %206 = vmatprep.subr.mxu0 %v156
    %207 = vmatpush1.msra.mxu0 %v155
    %208 = vmatprep.subr.mxu0 0.0
    %209 = vmatpush2.msra.mxu0 0.0
    %210 = vmatprep.subr.mxu0 0.0
    %211 = vmatpush2.msra.mxu0 0.0
    %212 = vmatprep.subr.mxu0 0.0
    %213 = vmatpush2.msra.mxu0 0.0
    %214 = vmatprep.subr.mxu0 0.0
    %215 = vmatpush2.msra.mxu0 0.0
    %216 = vmatprep.subr.mxu0 0.0
    %217 = vmatpush2.msra.mxu0 0.0
    %218 = vmatprep.subr.mxu0 0.0
    %219 = vmatpush2.msra.mxu0 0.0
    %220 = vmatprep.subr.mxu0 0.0
    %221 = vmatpush2.msra.mxu0 0.0
    %222 = vmatprep.subr.mxu0 0.0
    %223 = vmatpush2.msra.mxu0 0.0
    %224 = vmatprep.subr.mxu0 0.0
    %225 = vmatpush2.msra.mxu0 0.0
    %226 = vmatprep.subr.mxu0 0.0
    %227 = vmatpush2.msra.mxu0 0.0
    %228 = vmatprep.subr.mxu0 0.0
    %229 = vmatpush2.msra.mxu0 0.0
    %230 = vmatprep.subr.mxu0 0.0
    %231 = vmatpush2.msra.mxu0 0.0
    %232 = vmatprep.subr.mxu0 0.0
    %233 = vmatpush2.msra.mxu0 0.0
    %234 = vmatprep.subr.mxu0 0.0
    %235 = vmatpush2.msra.mxu0 0.0
    %236 = vmatprep.subr.mxu0 0.0
    %237 = vmatpush2.msra.mxu0 0.0
    %238 = vmatprep.subr.mxu0 0.0
    %239 = vmatpush2.msra.mxu0 0.0
    %240 = vmatprep.mubr.f32.mxu0 0.0
    %241 = vmatmul.mubr.f32.gmra.mxu0 %v165
    %v242 = vpop.f32.mrf.mxu0
    %v243 = vadd.f32 0.0, %v242
    %v244 = vpop.f32.mrf.mxu0
    %v245 = vadd.f32 0.0, %v244
    %246 = vmatprep.mubr.f32.mxu0 0.0
    %247 = vmatmul.mubr.f32.gmra.mxu0 %v168
    %v248 = vpop.f32.mrf.mxu0
    %v249 = vadd.f32 0.0, %v248
    %v250 = vpop.f32.mrf.mxu0
    %v251 = vadd.f32 0.0, %v250
    %252 = vmatprep.mubr.f32.mxu0 0.0
    %253 = vmatmul.mubr.f32.gmra.mxu0 %v171
    %v254 = vpop.f32.mrf.mxu0
    %v255 = vadd.f32 0.0, %v254
    %v256 = vpop.f32.mrf.mxu0
    %v257 = vadd.f32 0.0, %v256
    %258 = vmatprep.mubr.f32.mxu0 0.0
    %259 = vmatmul.mubr.f32.gmra.mxu0 %v174
    %v260 = vpop.f32.mrf.mxu0
    %v261 = vadd.f32 0.0, %v260
    %v262 = vpop.f32.mrf.mxu0
    %v263 = vadd.f32 0.0, %v262
    %264 = vdwg.mxu0
    %265 = vst [vmem:[#allocation2] sm:$0xff] %v243
    %266 = vst [vmem:[#allocation2 + $0x8] sm:$0xff] %v245
    %267 = vst [vmem:[#allocation2 + $0x10] sm:$0xff] %v249
    %268 = vst [vmem:[#allocation2 + $0x18] sm:$0xff] %v251
    %269 = vst [vmem:[#allocation2 + $0x20] sm:$0xff] %v255
    %270 = vst [vmem:[#allocation2 + $0x28] sm:$0xff] %v257
    %271 = vst [vmem:[#allocation2 + $0x30] sm:$0xff] %v261
    %272 = vst [vmem:[#allocation2 + $0x38] sm:$0xff] %v263
    %v273 = vld [vmem:[%s3] sm:$0x1]
    %v274 = vld [vmem:[#allocation2] sm:$0xff]
    %v275 = vld [vmem:[#allocation2 + $0x10] sm:$0x3f]
    %v276 = vld [vmem:[#allocation2 + $0x20] sm:$0xff]
    %v277 = vld [vmem:[#allocation2 + $0x30] sm:$0x3f]
    %v278 = vadd.f32 %v274, 0.0
    %v279 = vadd.f32 %v275, 0.0
    %v280 = vadd.f32 %v276, 0.0
    %v281 = vadd.f32 %v277, 0.0
    %v282 = vld [vmem:[#allocation2] sm:$0xfe]
    %v283 = vld [vmem:[#allocation2 + $0x10] sm:$0x7f]
    %v284 = vld [vmem:[#allocation2 + $0x20] sm:$0xfe]
    %v285 = vld [vmem:[#allocation2 + $0x30] sm:$0x7f]
    %vm290 = vcmask 1046528
    %v291 = vrot.slane %v282, 1
    %v292 = vrot.slane %v283, 1
    %v293 = vsel %vm290, %v291, %v292
    %v294 = vrot.slane %v284, 1
    %v295 = vrot.slane %v285, 1
    %v296 = vsel %vm290, %v294, %v295
    %297 = vrot.lane.b32.xlu0 %v293, 112
    %v298 = vpop.permute.xlu0 %297
    %299 = vrot.lane.b32.xlu0 %v292, 112
    %v300 = vpop.permute.xlu0 %299
    %301 = vrot.lane.b32.xlu0 %v296, 112
    %v302 = vpop.permute.xlu0 %301
    %303 = vrot.lane.b32.xlu0 %v295, 112
    %v304 = vpop.permute.xlu0 %303
    %v309 = vadd.f32 %v278, %v298
    %v310 = vadd.f32 %v279, %v300
    %v311 = vadd.f32 %v280, %v302
    %v312 = vadd.f32 %v281, %v304
    %v313 = vld [vmem:[#allocation2] sm:$0xfc]
    %v314 = vld [vmem:[#allocation2 + $0x10] sm:$0xff]
    %v315 = vld [vmem:[#allocation2 + $0x20] sm:$0xfc]
    %v316 = vld [vmem:[#allocation2 + $0x30] sm:$0xff]
    %vm321 = vcmask 1045504
    %v322 = vrot.slane %v313, 2
    %v323 = vrot.slane %v314, 2
    %v324 = vsel %vm321, %v322, %v323
    %v325 = vrot.slane %v315, 2
    %v326 = vrot.slane %v316, 2
    %v327 = vsel %vm321, %v325, %v326
    %328 = vrot.lane.b32.xlu0 %v324, 96
    %v329 = vpop.permute.xlu0 %328
    %330 = vrot.lane.b32.xlu0 %v323, 96
    %v331 = vpop.permute.xlu0 %330
    %332 = vrot.lane.b32.xlu0 %v327, 96
    %v333 = vpop.permute.xlu0 %332
    %334 = vrot.lane.b32.xlu0 %v326, 96
    %v335 = vpop.permute.xlu0 %334
    %v340 = vadd.f32 %v309, %v329
    %v341 = vadd.f32 %v310, %v331
    %v342 = vadd.f32 %v311, %v333
    %v343 = vadd.f32 %v312, %v335
    %v345 = vlaneseq
    %v346 = vshrl.u32 %v345, 7
    %v347 = vsub.s32 0, %v346
    %v348 = vrot.slane %v273, %v347
    %v350 = vadd.f32 %v340, %v348
    %v351 = vadd.f32 %v341, %v348
    %v352 = vadd.f32 %v342, %v348
    %v353 = vadd.f32 %v343, %v348
    %v354 = vmax.f32 %v350, 0.0
    %v355 = vmax.f32 %v351, 0.0
    %v356 = vmax.f32 %v352, 0.0
    %v357 = vmax.f32 %v353, 0.0
    %vm358 = vcmask 130048
    %v359 = vsel %vm358, %v354, -inf
    %vm360 = vcmask 128000
    %v361 = vsel %vm360, %v355, -inf
    %v362 = vmax.f32 %v359, %v361
    %v363 = vrot.slane %v362, 4
    %v364 = vmax.f32 %v362, %v363
    %v365 = vrot.slane %v364, 2
    %v366 = vmax.f32 %v364, %v365
    %v367 = vrot.slane %v366, 1
    %v368 = vmax.f32 %v366, %v367
    %v369 = vsel %vm358, %v356, -inf
    %v370 = vsel %vm360, %v357, -inf
    %v371 = vmax.f32 %v369, %v370
    %v372 = vrot.slane %v371, 4
    %v373 = vmax.f32 %v371, %v372
    %v374 = vrot.slane %v373, 2
    %v375 = vmax.f32 %v373, %v374
    %v376 = vrot.slane %v375, 1
    %v377 = vmax.f32 %v375, %v376
    %v378 = vld [vmem:[#allocation2 + $0x10] sm:$0x1f]
    %v379 = vld [vmem:[#allocation2 + $0x30] sm:$0x1f]
    %v380 = vadd.f32 %v378, 0.0
    %v381 = vadd.f32 %v379, 0.0
    %v384 = vrot.slane %v275, 1
    %v385 = vsel %vm290, %v291, %v384
    %v386 = vrot.slane %v277, 1
    %v387 = vsel %vm290, %v294, %v386
    %388 = vrot.lane.b32.xlu0 %v385, 112
    %v389 = vpop.permute.xlu0 %388
    %390 = vrot.lane.b32.xlu0 %v384, 112
    %v391 = vpop.permute.xlu0 %390
    %392 = vrot.lane.b32.xlu0 %v387, 112
    %v393 = vpop.permute.xlu0 %392
    %394 = vrot.lane.b32.xlu0 %v386, 112
    %v395 = vpop.permute.xlu0 %394
    %v400 = vadd.f32 %v278, %v389
    %v401 = vadd.f32 %v380, %v391
    %v402 = vadd.f32 %v280, %v393
    %v403 = vadd.f32 %v381, %v395
    %v404 = vrot.slane %v283, 2
    %v405 = vsel %vm321, %v322, %v404
    %v406 = vrot.slane %v285, 2
    %v407 = vsel %vm321, %v325, %v406
    %408 = vrot.lane.b32.xlu0 %v405, 96
    %v409 = vpop.permute.xlu0 %408
    %410 = vrot.lane.b32.xlu0 %v404, 96
    %v411 = vpop.permute.xlu0 %410
    %412 = vrot.lane.b32.xlu0 %v407, 96
    %v413 = vpop.permute.xlu0 %412
    %414 = vrot.lane.b32.xlu0 %v406, 96
    %v415 = vpop.permute.xlu0 %414
    %v420 = vadd.f32 %v400, %v409
    %v421 = vadd.f32 %v401, %v411
    %v422 = vadd.f32 %v402, %v413
    %v423 = vadd.f32 %v403, %v415
    %v424 = vld [vmem:[#allocation2] sm:$0xf8]
    %v425 = vld [vmem:[#allocation2 + $0x20] sm:$0xf8]
    %vm428 = vcmask 1044480
    %v429 = vrot.slane %v424, 3
    %v430 = vrot.slane %v314, 3
    %v431 = vsel %vm428, %v429, %v430
    %v432 = vrot.slane %v425, 3
    %v433 = vrot.slane %v316, 3
    %v434 = vsel %vm428, %v432, %v433
    %435 = vrot.lane.b32.xlu0 %v431, 80
    %v436 = vpop.permute.xlu0 %435
    %437 = vrot.lane.b32.xlu0 %v430, 80
    %v438 = vpop.permute.xlu0 %437
    %439 = vrot.lane.b32.xlu0 %v434, 80
    %v440 = vpop.permute.xlu0 %439
    %441 = vrot.lane.b32.xlu0 %v433, 80
    %v442 = vpop.permute.xlu0 %441
    %v447 = vadd.f32 %v420, %v436
    %v448 = vadd.f32 %v421, %v438
    %v449 = vadd.f32 %v422, %v440
    %v450 = vadd.f32 %v423, %v442
    %451 = vrot.lane.b32.xlu0 %v348, 32
    %v452 = vpop.permute.xlu0 %451
    %v454 = vadd.f32 %v447, %v452
    %v455 = vadd.f32 %v448, %v452
    %v456 = vadd.f32 %v449, %v452
    %v457 = vadd.f32 %v450, %v452
    %v458 = vmax.f32 %v454, 0.0
    %v459 = vmax.f32 %v455, 0.0
    %v460 = vmax.f32 %v456, 0.0
    %v461 = vmax.f32 %v457, 0.0
    %vm462 = vcmask 523648
    %v463 = vsel %vm462, %v458, -inf
    %vm464 = vcmask 520576
    %v465 = vsel %vm464, %v459, -inf
    %v466 = vmax.f32 %v463, %v465
    %v467 = vrot.slane %v466, 4
    %v468 = vmax.f32 %v466, %v467
    %v469 = vrot.slane %v468, 2
    %v470 = vmax.f32 %v468, %v469
    %v471 = vrot.slane %v470, 1
    %v472 = vmax.f32 %v470, %v471
    %v473 = vsel %vm462, %v460, -inf
    %v474 = vsel %vm464, %v461, -inf
    %v475 = vmax.f32 %v473, %v474
    %v476 = vrot.slane %v475, 4
    %v477 = vmax.f32 %v475, %v476
    %v478 = vrot.slane %v477, 2
    %v479 = vmax.f32 %v477, %v478
    %v480 = vrot.slane %v479, 1
    %v481 = vmax.f32 %v479, %v480
    %v482 = vld [vmem:[#allocation2 + $0x10] sm:$0xf]
    %v483 = vld [vmem:[#allocation2 + $0x30] sm:$0xf]
    %v484 = vadd.f32 %v482, 0.0
    %v485 = vadd.f32 %v483, 0.0
    %v486 = vld [vmem:[#allocation2 + $0x8] sm:$0xfe]
    %v487 = vld [vmem:[#allocation2 + $0x18] sm:$0x1f]
    %v488 = vld [vmem:[#allocation2 + $0x28] sm:$0xfe]
    %v489 = vld [vmem:[#allocation2 + $0x38] sm:$0x1f]
    %v494 = vrot.slane %v486, 1
    %v495 = vrot.slane %v487, 1
    %v496 = vsel %vm290, %v494, %v495
    %v497 = vrot.slane %v488, 1
    %v498 = vrot.slane %v489, 1
    %v499 = vsel %vm290, %v497, %v498
    %500 = vrot.lane.b32.xlu0 %v496, 112
    %v501 = vpop.permute.xlu0 %500
    %502 = vrot.lane.b32.xlu0 %v495, 112
    %v503 = vpop.permute.xlu0 %502
    %504 = vrot.lane.b32.xlu0 %v499, 112
    %v505 = vpop.permute.xlu0 %504
    %506 = vrot.lane.b32.xlu0 %v498, 112
    %v507 = vpop.permute.xlu0 %506
    %v512 = vadd.f32 %v278, %v501
    %v513 = vadd.f32 %v484, %v503
    %v514 = vadd.f32 %v280, %v505
    %v515 = vadd.f32 %v485, %v507
    %v516 = vld [vmem:[#allocation2 + $0x8] sm:$0xfc]
    %v517 = vld [vmem:[#allocation2 + $0x18] sm:$0x3f]
    %v518 = vld [vmem:[#allocation2 + $0x28] sm:$0xfc]
    %v519 = vld [vmem:[#allocation2 + $0x38] sm:$0x3f]
    %v524 = vrot.slane %v516, 2
    %v525 = vrot.slane %v517, 2
    %v526 = vsel %vm321, %v524, %v525
    %v527 = vrot.slane %v518, 2
    %v528 = vrot.slane %v519, 2
    %v529 = vsel %vm321, %v527, %v528
    %530 = vrot.lane.b32.xlu0 %v526, 96
    %v531 = vpop.permute.xlu0 %530
    %532 = vrot.lane.b32.xlu0 %v525, 96
    %v533 = vpop.permute.xlu0 %532
    %534 = vrot.lane.b32.xlu0 %v529, 96
    %v535 = vpop.permute.xlu0 %534
    %536 = vrot.lane.b32.xlu0 %v528, 96
    %v537 = vpop.permute.xlu0 %536
    %v542 = vadd.f32 %v512, %v531
    %v543 = vadd.f32 %v513, %v533
    %v544 = vadd.f32 %v514, %v535
    %v545 = vadd.f32 %v515, %v537
    %v546 = vld [vmem:[#allocation2 + $0x8] sm:$0xf8]
    %v547 = vld [vmem:[#allocation2 + $0x18] sm:$0x7f]
    %v548 = vld [vmem:[#allocation2 + $0x28] sm:$0xf8]
    %v549 = vld [vmem:[#allocation2 + $0x38] sm:$0x7f]
    %v554 = vrot.slane %v546, 3
    %v555 = vrot.slane %v547, 3
    %v556 = vsel %vm428, %v554, %v555
    %v557 = vrot.slane %v548, 3
    %v558 = vrot.slane %v549, 3
    %v559 = vsel %vm428, %v557, %v558
    %560 = vrot.lane.b32.xlu0 %v556, 80
    %v561 = vpop.permute.xlu0 %560
    %562 = vrot.lane.b32.xlu0 %v555, 80
    %v563 = vpop.permute.xlu0 %562
    %564 = vrot.lane.b32.xlu0 %v559, 80
    %v565 = vpop.permute.xlu0 %564
    %566 = vrot.lane.b32.xlu0 %v558, 80
    %v567 = vpop.permute.xlu0 %566
    %v572 = vadd.f32 %v542, %v561
    %v573 = vadd.f32 %v543, %v563
    %v574 = vadd.f32 %v544, %v565
    %v575 = vadd.f32 %v545, %v567
    %v576 = vld [vmem:[#allocation2 + $0x8] sm:$0xf0]
    %v577 = vld [vmem:[#allocation2 + $0x18] sm:$0xff]
    %v578 = vld [vmem:[#allocation2 + $0x28] sm:$0xf0]
    %v579 = vld [vmem:[#allocation2 + $0x38] sm:$0xff]
    %vm584 = vcmask 1043456
    %v585 = vrot.slane %v576, 4
    %v586 = vrot.slane %v577, 4
    %v587 = vsel %vm584, %v585, %v586
    %v588 = vrot.slane %v578, 4
    %v589 = vrot.slane %v579, 4
    %v590 = vsel %vm584, %v588, %v589
    %591 = vrot.lane.b32.xlu0 %v587, 64
    %v592 = vpop.permute.xlu0 %591
    %593 = vrot.lane.b32.xlu0 %v586, 64
    %v594 = vpop.permute.xlu0 %593
    %595 = vrot.lane.b32.xlu0 %v590, 64
    %v596 = vpop.permute.xlu0 %595
    %597 = vrot.lane.b32.xlu0 %v589, 64
    %v598 = vpop.permute.xlu0 %597
    %v603 = vadd.f32 %v572, %v592
    %v604 = vadd.f32 %v573, %v594
    %v605 = vadd.f32 %v574, %v596
    %v606 = vadd.f32 %v575, %v598
    %607 = vrot.lane.b32.xlu0 %v348, 80
    %v608 = vpop.permute.xlu0 %607
    %v610 = vadd.f32 %v603, %v608
    %v611 = vadd.f32 %v604, %v608
    %v612 = vadd.f32 %v605, %v608
    %v613 = vadd.f32 %v606, %v608
    %v614 = vmax.f32 %v610, 0.0
    %v615 = vmax.f32 %v611, 0.0
    %v616 = vmax.f32 %v612, 0.0
    %v617 = vmax.f32 %v613, 0.0
    %vm618 = vcmask 1048448
    %v619 = vsel %vm618, %v614, -inf
    %vm620 = vcmask 1044352
    %v621 = vsel %vm620, %v615, -inf
    %v622 = vmax.f32 %v619, %v621
    %v623 = vrot.slane %v622, 4
    %v624 = vmax.f32 %v622, %v623
    %v625 = vrot.slane %v624, 2
    %v626 = vmax.f32 %v624, %v625
    %v627 = vrot.slane %v626, 1
    %v628 = vmax.f32 %v626, %v627
    %v629 = vsel %vm618, %v616, -inf
    %v630 = vsel %vm620, %v617, -inf
    %v631 = vmax.f32 %v629, %v630
    %v632 = vrot.slane %v631, 4
    %v633 = vmax.f32 %v631, %v632
    %v634 = vrot.slane %v633, 2
    %v635 = vmax.f32 %v633, %v634
    %v636 = vrot.slane %v635, 1
    %v637 = vmax.f32 %v635, %v636
    %vm640 = vcmask 1041409
    %v641 = vsel %vm640, %v377, %v368
    %v645 = vsel %vm640, %v481, %v472
    %646 = vrot.lane.b32.xlu0 %v645, 96
    %v647 = vpop.permute.xlu0 %646
    %v651 = vsel %vm640, %v637, %v628
    %652 = vrot.lane.b32.xlu0 %v651, 48
    %v653 = vpop.permute.xlu0 %652
    %v655 = vsel %vm358, %v641, %v647
    %v656 = vsel %vm163, %v655, %v653
    %v657 = vld [vmem:[%s4] sm:$0xff]
    %v658 = vld [vmem:[%s4 + $0x8] sm:$0xff]
    %v659 = vld [vmem:[%s4 + $0x10] sm:$0xff]
    %v660 = vld [vmem:[%s4 + $0x18] sm:$0xff]
    %v661 = vld [vmem:[%s4 + $0x20] sm:$0xff]
    %v662 = vld [vmem:[%s4 + $0x28] sm:$0xff]
    %v663 = vld [vmem:[%s5] sm:$0x1]
    %v665 = vlaneseq
    %v666 = vshrl.u32 %v665, 7
    %v667 = vsub.s32 0, %v666
    %v668 = vrot.slane %v663, %v667
    %vm670 = vcmask 392192
    %v672 = vsel %vm670, %v656, 0
    %674 = vmatprep.subr.mxu0 0.0
    %675 = vmatpush1.msra.mxu0 0.0
    %676 = vmatprep.subr.mxu0 0.0
    %677 = vmatpush1.msra.mxu0 0.0
    %678 = vmatprep.subr.mxu0 0.0
    %679 = vmatpush1.msra.mxu0 0.0
    %680 = vmatprep.subr.mxu0 0.0
    %681 = vmatpush1.msra.mxu0 0.0
    %682 = vmatprep.subr.mxu0 0.0
    %683 = vmatpush1.msra.mxu0 0.0
    %684 = vmatprep.subr.mxu0 0.0
    %685 = vmatpush1.msra.mxu0 0.0
    %686 = vmatprep.subr.mxu0 0.0
    %687 = vmatpush1.msra.mxu0 0.0
    %688 = vmatprep.subr.mxu0 0.0
    %689 = vmatpush1.msra.mxu0 0.0
    %690 = vmatprep.subr.mxu0 0.0
    %691 = vmatpush1.msra.mxu0 0.0
    %692 = vmatprep.subr.mxu0 0.0
    %693 = vmatpush1.msra.mxu0 0.0
    %694 = vmatprep.subr.mxu0 0.0
    %695 = vmatpush1.msra.mxu0 %v662
    %696 = vmatprep.subr.mxu0 0.0
    %697 = vmatpush1.msra.mxu0 %v661
    %698 = vmatprep.subr.mxu0 0.0
    %699 = vmatpush1.msra.mxu0 %v660
    %700 = vmatprep.subr.mxu0 0.0
    %701 = vmatpush1.msra.mxu0 %v659
    %702 = vmatprep.subr.mxu0 0.0
    %703 = vmatpush1.msra.mxu0 %v658
    %704 = vmatprep.subr.mxu0 0.0
    %705 = vmatpush1.msra.mxu0 %v657
    %706 = vmatprep.subr.mxu0 0.0
    %707 = vmatpush2.msra.mxu0 0.0
    %708 = vmatprep.subr.mxu0 0.0
    %709 = vmatpush2.msra.mxu0 0.0
    %710 = vmatprep.subr.mxu0 0.0
    %711 = vmatpush2.msra.mxu0 0.0
    %712 = vmatprep.subr.mxu0 0.0
    %713 = vmatpush2.msra.mxu0 0.0
    %714 = vmatprep.subr.mxu0 0.0
    %715 = vmatpush2.msra.mxu0 0.0
    %716 = vmatprep.subr.mxu0 0.0
    %717 = vmatpush2.msra.mxu0 0.0
    %718 = vmatprep.subr.mxu0 0.0
    %719 = vmatpush2.msra.mxu0 0.0
    %720 = vmatprep.subr.mxu0 0.0
    %721 = vmatpush2.msra.mxu0 0.0
    %722 = vmatprep.subr.mxu0 0.0
    %723 = vmatpush2.msra.mxu0 0.0
    %724 = vmatprep.subr.mxu0 0.0
    %725 = vmatpush2.msra.mxu0 0.0
    %726 = vmatprep.subr.mxu0 0.0
    %727 = vmatpush2.msra.mxu0 0.0
    %728 = vmatprep.subr.mxu0 0.0
    %729 = vmatpush2.msra.mxu0 0.0
    %730 = vmatprep.subr.mxu0 0.0
    %731 = vmatpush2.msra.mxu0 0.0
    %732 = vmatprep.subr.mxu0 0.0
    %733 = vmatpush2.msra.mxu0 0.0
    %734 = vmatprep.subr.mxu0 0.0
    %735 = vmatpush2.msra.mxu0 0.0
    %736 = vmatprep.subr.mxu0 0.0
    %737 = vmatpush2.msra.mxu0 0.0
    %738 = vmatprep.mubr.f32.mxu0 0.0
    %739 = vmatmul.mubr.f32.gmra.mxu0 %v672
    %v740 = vpop.f32.mrf.mxu0
    %v741 = vadd.f32 %v668, %v740
    %v742 = vpop.f32.mrf.mxu0
    %743 = vdwg.mxu0
    %744 = vst [vmem:[#allocation3] sm:$0x3] %v741
    // Predicated region
    $region26: #{tpu_custom_call.1} parent=1 // pred_check
      _
    $region27: #{tpu_custom_call.1} parent=1 // pred_check_branch
      %746 = sbr.rel (0) target = $region29
    $region28: #{tpu_custom_call.1} parent=1 // pred_region
      %s748 = ssub.s32 32, 32
      %749 = vsyncadd [#allocation4], %s748
      %s751 = sshll.u32 [#allocation3], 4
      %s752 = int_to_ptr.vmem [resolvable:$true] %s751
      %754 = dma.vmem_to_hbm [thread:$0]  %s752, 32, %s6, [#allocation4]
    $region29: #{tpu_custom_call.1} parent=1 // pred_fallthru
      _
    // Predicated region
    $region30: #{tpu_custom_call.1} parent=1 // pred_check
      _
    $region31: #{tpu_custom_call.1} parent=1 // pred_check_branch
      %756 = sbr.rel (0) target = $region33
    $region32: #{tpu_custom_call.1} parent=1 // pred_region
      %757 = dma.done [#allocation4], 32
    $region33: #{tpu_custom_call.1} parent=1 // pred_fallthru
      _
    %758 = vsyncpa [#allocation4], 1

</llo_original>
